<compile_context>
chip_gen: v7x
topology: tpu7x:2x2x1
jax: 0.10.0
libtpu: 0.0.40
codegen_flags: <defaults>
</compile_context>

<pallas_src>
import functools

import jax
import jax.numpy as jnp
from jax import lax
from jax.experimental import pallas as pl
from jax.experimental.pallas import tpu as pltpu

_EPS = 1e-8


def _split_f32_to_bf16(a):
    """Split f32 into (hi, lo) bf16 parts so hi + lo ~= a to ~16 mantissa bits."""
    hi = a.astype(jnp.bfloat16)
    lo = (a - hi.astype(jnp.float32)).astype(jnp.bfloat16)
    return hi, lo


def _gram_3pass(a, b):
    """Near-f32-accurate a @ b.T using three single-pass bf16 MXU matmuls."""
    dn = (((1,), (1,)), ((), ()))
    a_hi, a_lo = _split_f32_to_bf16(a)
    b_hi, b_lo = _split_f32_to_bf16(b)
    acc = lax.dot_general(a_hi, b_hi, dn, preferred_element_type=jnp.float32)
    acc += lax.dot_general(a_hi, b_lo, dn, preferred_element_type=jnp.float32)
    acc += lax.dot_general(a_lo, b_hi, dn, preferred_element_type=jnp.float32)
    return acc


def _ccl_kernel(temp_ref, marg_ref, xr_ref, xc_ref, p_ref, mask_ref, mdiag_ref,
                out_ref, sum_all, sum_pos, *, pos_collected: bool):
    j = pl.program_id(1)
    n_j = pl.num_programs(1)

    inv_t = 1.0 / temp_ref[0]
    shift = -(marg_ref[0] * inv_t)          # (s - m)/t == s*inv_t + shift

    @pl.when(j == 0)
    def _init():
        sum_all[...] = jnp.zeros_like(sum_all)
        sum_pos[...] = jnp.zeros_like(sum_pos)

    # --- normalize the row / column tiles (O(T*D) VPU work) -----------------
    xr = xr_ref[...]                                              # (TM, Dp)
    xc = xc_ref[...]                                              # (TN, Dp)
    xr_inv = 1.0 / jnp.maximum(
        jnp.sqrt(jnp.sum(xr * xr, axis=1, keepdims=True)), _EPS)  # (TM, 1)
    xc_inv = 1.0 / jnp.maximum(
        jnp.sqrt(jnp.sum(xc * xc, axis=1, keepdims=True)), _EPS)  # (TN, 1)
    xr_hat = xr * xr_inv
    xc_hat = xc * xc_inv

    # --- cosine similarity tile + exp (diagonal handled analytically) -------
    sim = _gram_3pass(xr_hat, xc_hat)                             # (TM, TN)
    zone = jnp.exp(sim * inv_t + shift)                           # (TM, TN)

    sum_all[...] += jnp.sum(zone, axis=1, keepdims=True)
    if pos_collected:
        sum_pos[...] += jnp.sum(zone * mask_ref[...], axis=1, keepdims=True)

    @pl.when(j == n_j - 1)
    def _finalize():
        # self-similarity (diagonal) correction: one exp per row
        self_sim = jnp.sum(xr_hat * xr_hat, axis=1, keepdims=True)  # ~1.0
        d = jnp.exp(self_sim * inv_t + shift)                       # (TM, 1)

        # instance-to-proxy positive term
        pr = p_ref[...]
        pr_inv = 1.0 / jnp.maximum(
            jnp.sqrt(jnp.sum(pr * pr, axis=1, keepdims=True)), _EPS)
        pcos = jnp.sum(xr_hat * (pr * pr_inv), axis=1, keepdims=True)
        p_pos = jnp.exp(pcos * inv_t + shift)                       # (TM, 1)

        denom = p_pos + sum_all[...] - d
        if pos_collected:
            numer = p_pos + sum_pos[...] - mdiag_ref[...] * d
        else:
            numer = p_pos
        out_ref[...] = -jnp.log(numer / denom)                      # (TM, 1)


def _row_tile(b):
    for t in (256, 128, 64, 32, 16, 8):         # multiples of 8 sublanes
        if b % t == 0:
            return t
    return b                                    # full extent (always legal)


def _col_tile(b):
    for t in (512, 256, 128):                   # multiples of 128 lanes
        if b % t == 0:
            return t
    return b                                    # full extent (always legal)


def conditional_contrastive_loss(inst_embed, proxy, negative_mask, labels,
                                 temperature, margin,
                                 pos_collected_numerator=True):
    x = inst_embed.astype(jnp.float32)
    p = proxy.astype(jnp.float32)
    B, D = x.shape

    # pad feature dim to a lane multiple (zeros change neither dots nor norms)
    Dp = ((D + 127) // 128) * 128
    if Dp != D:
        pad = ((0, 0), (0, Dp - D))
        x = jnp.pad(x, pad)
        p = jnp.pad(p, pad)

    # glue: gather mask rows by label (torch: negative_mask[labels.long()])
    # TODO(synk): could be moved in-kernel via scalar-prefetched labels + manual
    # row DMAs to avoid materializing the (B, B) gathered mask in HBM.
    mask_rows = negative_mask[labels.astype(jnp.int32)].astype(jnp.float32)  # (B,B)
    mask_diag = jnp.diagonal(mask_rows)[:, None].astype(jnp.float32)         # (B,1)

    TM = _row_tile(B)
    TN = _col_tile(B)
    n_i, n_j = B // TM, B // TN

    temp = jnp.asarray([temperature], dtype=jnp.float32)
    marg = jnp.asarray([margin], dtype=jnp.float32)

    kernel = functools.partial(_ccl_kernel,
                               pos_collected=pos_collected_numerator)

    per_sample = pl.pallas_call(
        kernel,
        out_shape=jax.ShapeDtypeStruct((B, 1), jnp.float32),
        grid_spec=pltpu.PrefetchScalarGridSpec(
            num_scalar_prefetch=0,
            grid=(n_i, n_j),
            in_specs=[
                pl.BlockSpec(memory_space=pltpu.SMEM),          # temperature
                pl.BlockSpec(memory_space=pltpu.SMEM),          # margin
                pl.BlockSpec((TM, Dp), lambda i, j: (i, 0)),    # x row tile
                pl.BlockSpec((TN, Dp), lambda i, j: (j, 0)),    # x col tile
                pl.BlockSpec((TM, Dp), lambda i, j: (i, 0)),    # proxy row tile
                pl.BlockSpec((TM, TN), lambda i, j: (i, j)),    # mask tile
                pl.BlockSpec((TM, 1), lambda i, j: (i, 0)),     # mask diag
            ],
            out_specs=pl.BlockSpec((TM, 1), lambda i, j: (i, 0)),
            scratch_shapes=[pltpu.VMEM((TM, 1), jnp.float32),   # sum_all
                            pltpu.VMEM((TM, 1), jnp.float32)],  # sum_pos
        ),
        compiler_params=pltpu.CompilerParams(
            dimension_semantics=("parallel", "arbitrary"),
            vmem_limit_bytes=48 * 1024 * 1024),
    )(temp, marg, x, x, p, mask_rows, mask_diag)

    # final mean over B (O(B) glue)
    return jnp.mean(per_sample)


def _reference(inst_embed, proxy, negative_mask, labels, temperature, margin,
               pos_collected_numerator=True):
    eps = 1e-8
    x = inst_embed.astype(jnp.float32)
    p = proxy.astype(jnp.float32)
    B = x.shape[0]
    xn = jnp.sqrt(jnp.sum(x * x, axis=1, keepdims=True))
    dots = jnp.dot(x, x.T, precision=lax.Precision.HIGHEST)
    sim = dots / jnp.maximum(xn * xn.T, eps)
    off = 1.0 - jnp.eye(B, dtype=jnp.float32)
    zone = jnp.exp((sim - margin) / temperature) * off
    pn = jnp.sqrt(jnp.sum(p * p, axis=1))
    pcos = jnp.sum(x * p, axis=1) / jnp.maximum(xn[:, 0] * pn, eps)
    ppos = jnp.exp((pcos - margin) / temperature)
    mask = negative_mask[labels.astype(jnp.int32)].astype(jnp.float32) * off
    if pos_collected_numerator:
        num = jnp.sum(zone * mask, axis=1) + ppos
    else:
        num = ppos
    den = ppos + jnp.sum(zone, axis=1)
    return -jnp.mean(jnp.log(num / den))


if __name__ == "__main__":
    B, D, NUM_CLASSES = 8, 32, 4
    temperature = 0.5
    margin = 0.0  # module-level `margin = 0` in the original script

    key = jax.random.PRNGKey(0)
    k1, k2, k3, k4 = jax.random.split(key, 4)
    inst_embed = jax.random.normal(k1, (B, D), dtype=jnp.float32)
    proxy = jax.random.normal(k2, (B, D), dtype=jnp.float32)
    negative_mask = (jax.random.uniform(k3, (NUM_CLASSES, B)) > 0.5).astype(jnp.float32)
    labels = jax.random.randint(k4, (B,), 0, NUM_CLASSES)

    loss = conditional_contrastive_loss(inst_embed, proxy, negative_mask,
                                        labels, temperature, margin,
                                        pos_collected_numerator=True)
    loss = jax.block_until_ready(loss)

    ref = _reference(inst_embed, proxy, negative_mask, labels,
                     temperature, margin, pos_collected_numerator=True)
    assert jnp.allclose(loss, ref, rtol=2e-4, atol=2e-4), (loss, ref)

    print("KERNEL_OK")
</pallas_src>

<mosaic_0001>
module attributes {stable_mosaic.version = 11 : i64} {
  func.func @_ccl_kernel(%arg0: i32, %arg1: i32, %arg2: memref<1xf32, #tpu.memory_space<smem>>, %arg3: memref<1xf32, #tpu.memory_space<smem>>, %arg4: memref<8x128xf32, #tpu.memory_space<vmem>>, %arg5: memref<8x128xf32, #tpu.memory_space<vmem>>, %arg6: memref<8x128xf32, #tpu.memory_space<vmem>>, %arg7: memref<8x8xf32, #tpu.memory_space<vmem>>, %arg8: memref<8x1xf32, #tpu.memory_space<vmem>>, %arg9: memref<8x1xf32, #tpu.memory_space<vmem>>, %arg10: memref<8x1xf32, #tpu.memory_space<vmem>>, %arg11: memref<8x1xf32, #tpu.memory_space<vmem>>) attributes {dimension_semantics = [#tpu.dimension_semantics<parallel>, #tpu.dimension_semantics<arbitrary>], iteration_bounds = array<i64: 1, 1>, scalar_prefetch = 0 : i64, scratch_operands = 2 : i64, tpu.core_type = #tpu.core_type<tc>, window_params = [{transform_indices = @transform_0, window_bounds = array<i64: 1>}, {transform_indices = @transform_1, window_bounds = array<i64: 1>}, {transform_indices = @transform_2, window_bounds = array<i64: 8, 128>}, {transform_indices = @transform_3, window_bounds = array<i64: 8, 128>}, {transform_indices = @transform_4, window_bounds = array<i64: 8, 128>}, {transform_indices = @transform_5, window_bounds = array<i64: 8, 8>}, {transform_indices = @transform_6, window_bounds = array<i64: 8, 1>}, {transform_indices = @transform_7, window_bounds = array<i64: 8, 1>}]} {
    %c0 = arith.constant 0 : index
    %0 = memref.load %arg2[%c0] : memref<1xf32, #tpu.memory_space<smem>>
    %cst = arith.constant 1.000000e+00 : f32
    %1 = arith.divf %cst, %0 : f32
    %c0_0 = arith.constant 0 : index
    %2 = memref.load %arg3[%c0_0] : memref<1xf32, #tpu.memory_space<smem>>
    %3 = arith.mulf %2, %1 : f32
    %cst_1 = arith.constant 0.000000e+00 : f32
    %4 = arith.subf %cst_1, %3 : f32
    %c0_i32 = arith.constant 0 : i32
    %5 = arith.cmpi eq, %arg1, %c0_i32 : i32
    %6 = arith.extui %5 : i1 to i32
    %c0_i32_2 = arith.constant 0 : i32
    %7 = arith.cmpi ne, %6, %c0_i32_2 : i32
    scf.if %7 {
      %cst_30 = arith.constant 0.000000e+00 : f32
      %63 = vector.broadcast %cst_30 : f32 to vector<8x1xf32>
      %c0_31 = arith.constant 0 : index
      %c0_32 = arith.constant 0 : index
      %64 = vector.load %arg10[%c0_31, %c0_32] : memref<8x1xf32, #tpu.memory_space<vmem>>, vector<8x1xf32>
      tpu.vector_store %arg10[%c0_31, %c0_32], %63 {strides = array<i32>} : memref<8x1xf32, #tpu.memory_space<vmem>>, vector<8x1xf32>,
      %cst_33 = arith.constant 0.000000e+00 : f32
      %65 = vector.broadcast %cst_33 : f32 to vector<8x1xf32>
      %c0_34 = arith.constant 0 : index
      %c0_35 = arith.constant 0 : index
      %66 = vector.load %arg11[%c0_34, %c0_35] : memref<8x1xf32, #tpu.memory_space<vmem>>, vector<8x1xf32>
      tpu.vector_store %arg11[%c0_34, %c0_35], %65 {strides = array<i32>} : memref<8x1xf32, #tpu.memory_space<vmem>>, vector<8x1xf32>,
    } else {
    }
    %c0_3 = arith.constant 0 : index
    %c0_4 = arith.constant 0 : index
    %8 = vector.load %arg4[%c0_3, %c0_4] : memref<8x128xf32, #tpu.memory_space<vmem>>, vector<8x128xf32>
    %c0_5 = arith.constant 0 : index
    %c0_6 = arith.constant 0 : index
    %9 = vector.load %arg5[%c0_5, %c0_6] : memref<8x128xf32, #tpu.memory_space<vmem>>, vector<8x128xf32>
    %10 = arith.mulf %8, %8 : vector<8x128xf32>
    %cst_7 = arith.constant dense<0.000000e+00> : vector<8xf32>
    %11 = vector.multi_reduction <add>, %10, %cst_7 [1] : vector<8x128xf32> to vector<8xf32>
    %12 = vector.shape_cast %11 : vector<8xf32> to vector<8x1xf32>
    %13 = math.sqrt %12 : vector<8x1xf32>
    %cst_8 = arith.constant 9.99999993E-9 : f32
    %14 = vector.broadcast %cst_8 : f32 to vector<8x1xf32>
    %15 = arith.maximumf %13, %14 : vector<8x1xf32>
    %cst_9 = arith.constant 1.000000e+00 : f32
    %16 = vector.broadcast %cst_9 : f32 to vector<8x1xf32>
    %17 = arith.divf %16, %15 : vector<8x1xf32>
    %18 = arith.mulf %9, %9 : vector<8x128xf32>
    %cst_10 = arith.constant dense<0.000000e+00> : vector<8xf32>
    %19 = vector.multi_reduction <add>, %18, %cst_10 [1] : vector<8x128xf32> to vector<8xf32>
    %20 = vector.shape_cast %19 : vector<8xf32> to vector<8x1xf32>
    %21 = math.sqrt %20 : vector<8x1xf32>
    %cst_11 = arith.constant 9.99999993E-9 : f32
    %22 = vector.broadcast %cst_11 : f32 to vector<8x1xf32>
    %23 = arith.maximumf %21, %22 : vector<8x1xf32>
    %cst_12 = arith.constant 1.000000e+00 : f32
    %24 = vector.broadcast %cst_12 : f32 to vector<8x1xf32>
    %25 = arith.divf %24, %23 : vector<8x1xf32>
    %26 = vector.broadcast %17 : vector<8x1xf32> to vector<8x128xf32>
    %27 = arith.mulf %8, %26 : vector<8x128xf32>
    %28 = vector.broadcast %25 : vector<8x1xf32> to vector<8x128xf32>
    %29 = arith.mulf %9, %28 : vector<8x128xf32>
    %30 = arith.truncf %27 : vector<8x128xf32> to vector<8x128xbf16>
    %31 = arith.extf %30 : vector<8x128xbf16> to vector<8x128xf32>
    %32 = arith.subf %27, %31 : vector<8x128xf32>
    %33 = arith.truncf %32 : vector<8x128xf32> to vector<8x128xbf16>
    %34 = arith.truncf %29 : vector<8x128xf32> to vector<8x128xbf16>
    %35 = arith.extf %34 : vector<8x128xbf16> to vector<8x128xf32>
    %36 = arith.subf %29, %35 : vector<8x128xf32>
    %37 = arith.truncf %36 : vector<8x128xf32> to vector<8x128xbf16>
    %cst_13 = arith.constant dense<0.000000e+00> : vector<8x8xf32>
    %38 = tpu.matmul %30, %34, %cst_13 {dimension_numbers = #tpu.dot_dimension_numbers<[1], [1], [0], [0], [0, 0, 1, 0], [], []>} : vector<8x128xbf16>, vector<8x128xbf16>, vector<8x8xf32> -> vector<8x8xf32>
    %cst_14 = arith.constant dense<0.000000e+00> : vector<8x8xf32>
    %39 = tpu.matmul %30, %37, %cst_14 {dimension_numbers = #tpu.dot_dimension_numbers<[1], [1], [0], [0], [0, 0, 1, 0], [], []>} : vector<8x128xbf16>, vector<8x128xbf16>, vector<8x8xf32> -> vector<8x8xf32>
    %40 = arith.addf %38, %39 : vector<8x8xf32>
    %cst_15 = arith.constant dense<0.000000e+00> : vector<8x8xf32>
    %41 = tpu.matmul %33, %34, %cst_15 {dimension_numbers = #tpu.dot_dimension_numbers<[1], [1], [0], [0], [0, 0, 1, 0], [], []>} : vector<8x128xbf16>, vector<8x128xbf16>, vector<8x8xf32> -> vector<8x8xf32>
    %42 = arith.addf %40, %41 : vector<8x8xf32>
    %43 = vector.broadcast %1 : f32 to vector<8x8xf32>
    %44 = arith.mulf %42, %43 : vector<8x8xf32>
    %45 = vector.broadcast %4 : f32 to vector<8x8xf32>
    %46 = arith.addf %44, %45 : vector<8x8xf32>
    %47 = math.exp %46 : vector<8x8xf32>
    %c0_16 = arith.constant 0 : index
    %c0_17 = arith.constant 0 : index
    %48 = vector.load %arg10[%c0_16, %c0_17] : memref<8x1xf32, #tpu.memory_space<vmem>>, vector<8x1xf32>
    %cst_18 = arith.constant dense<0.000000e+00> : vector<8xf32>
    %49 = vector.multi_reduction <add>, %47, %cst_18 [1] : vector<8x8xf32> to vector<8xf32>
    %50 = vector.shape_cast %49 : vector<8xf32> to vector<8x1xf32>
    %51 = arith.addf %48, %50 : vector<8x1xf32>
    %c0_19 = arith.constant 0 : index
    %c0_20 = arith.constant 0 : index
    %52 = vector.load %arg10[%c0_19, %c0_20] : memref<8x1xf32, #tpu.memory_space<vmem>>, vector<8x1xf32>
    tpu.vector_store %arg10[%c0_19, %c0_20], %51 {strides = array<i32>} : memref<8x1xf32, #tpu.memory_space<vmem>>, vector<8x1xf32>,
    %c0_21 = arith.constant 0 : index
    %c0_22 = arith.constant 0 : index
    %53 = vector.load %arg11[%c0_21, %c0_22] : memref<8x1xf32, #tpu.memory_space<vmem>>, vector<8x1xf32>
    %c0_23 = arith.constant 0 : index
    %c0_24 = arith.constant 0 : index
    %54 = vector.load %arg7[%c0_23, %c0_24] : memref<8x8xf32, #tpu.memory_space<vmem>>, vector<8x8xf32>
    %55 = arith.mulf %47, %54 : vector<8x8xf32>
    %cst_25 = arith.constant dense<0.000000e+00> : vector<8xf32>
    %56 = vector.multi_reduction <add>, %55, %cst_25 [1] : vector<8x8xf32> to vector<8xf32>
    %57 = vector.shape_cast %56 : vector<8xf32> to vector<8x1xf32>
    %58 = arith.addf %53, %57 : vector<8x1xf32>
    %c0_26 = arith.constant 0 : index
    %c0_27 = arith.constant 0 : index
    %59 = vector.load %arg11[%c0_26, %c0_27] : memref<8x1xf32, #tpu.memory_space<vmem>>, vector<8x1xf32>
    tpu.vector_store %arg11[%c0_26, %c0_27], %58 {strides = array<i32>} : memref<8x1xf32, #tpu.memory_space<vmem>>, vector<8x1xf32>,
    %c0_i32_28 = arith.constant 0 : i32
    %60 = arith.cmpi eq, %arg1, %c0_i32_28 : i32
    %61 = arith.extui %60 : i1 to i32
    %c0_i32_29 = arith.constant 0 : i32
    %62 = arith.cmpi ne, %61, %c0_i32_29 : i32
    scf.if %62 {
      %63 = arith.mulf %27, %27 : vector<8x128xf32>
      %cst_30 = arith.constant dense<0.000000e+00> : vector<8xf32>
      %64 = vector.multi_reduction <add>, %63, %cst_30 [1] : vector<8x128xf32> to vector<8xf32>
      %65 = vector.shape_cast %64 : vector<8xf32> to vector<8x1xf32>
      %66 = vector.broadcast %1 : f32 to vector<8x1xf32>
      %67 = arith.mulf %65, %66 : vector<8x1xf32>
      %68 = vector.broadcast %4 : f32 to vector<8x1xf32>
      %69 = arith.addf %67, %68 : vector<8x1xf32>
      %70 = math.exp %69 : vector<8x1xf32>
      %c0_31 = arith.constant 0 : index
      %c0_32 = arith.constant 0 : index
      %71 = vector.load %arg6[%c0_31, %c0_32] : memref<8x128xf32, #tpu.memory_space<vmem>>, vector<8x128xf32>
      %72 = arith.mulf %71, %71 : vector<8x128xf32>
      %cst_33 = arith.constant dense<0.000000e+00> : vector<8xf32>
      %73 = vector.multi_reduction <add>, %72, %cst_33 [1] : vector<8x128xf32> to vector<8xf32>
      %74 = vector.shape_cast %73 : vector<8xf32> to vector<8x1xf32>
      %75 = math.sqrt %74 : vector<8x1xf32>
      %cst_34 = arith.constant 9.99999993E-9 : f32
      %76 = vector.broadcast %cst_34 : f32 to vector<8x1xf32>
      %77 = arith.maximumf %75, %76 : vector<8x1xf32>
      %cst_35 = arith.constant 1.000000e+00 : f32
      %78 = vector.broadcast %cst_35 : f32 to vector<8x1xf32>
      %79 = arith.divf %78, %77 : vector<8x1xf32>
      %80 = vector.broadcast %79 : vector<8x1xf32> to vector<8x128xf32>
      %81 = arith.mulf %71, %80 : vector<8x128xf32>
      %82 = arith.mulf %27, %81 : vector<8x128xf32>
      %cst_36 = arith.constant dense<0.000000e+00> : vector<8xf32>
      %83 = vector.multi_reduction <add>, %82, %cst_36 [1] : vector<8x128xf32> to vector<8xf32>
      %84 = vector.shape_cast %83 : vector<8xf32> to vector<8x1xf32>
      %85 = vector.broadcast %1 : f32 to vector<8x1xf32>
      %86 = arith.mulf %84, %85 : vector<8x1xf32>
      %87 = vector.broadcast %4 : f32 to vector<8x1xf32>
      %88 = arith.addf %86, %87 : vector<8x1xf32>
      %89 = math.exp %88 : vector<8x1xf32>
      %c0_37 = arith.constant 0 : index
      %c0_38 = arith.constant 0 : index
      %90 = vector.load %arg10[%c0_37, %c0_38] : memref<8x1xf32, #tpu.memory_space<vmem>>, vector<8x1xf32>
      %91 = arith.addf %89, %90 : vector<8x1xf32>
      %92 = arith.subf %91, %70 : vector<8x1xf32>
      %c0_39 = arith.constant 0 : index
      %c0_40 = arith.constant 0 : index
      %93 = vector.load %arg11[%c0_39, %c0_40] : memref<8x1xf32, #tpu.memory_space<vmem>>, vector<8x1xf32>
      %94 = arith.addf %89, %93 : vector<8x1xf32>
      %c0_41 = arith.constant 0 : index
      %c0_42 = arith.constant 0 : index
      %95 = vector.load %arg8[%c0_41, %c0_42] : memref<8x1xf32, #tpu.memory_space<vmem>>, vector<8x1xf32>
      %96 = arith.mulf %95, %70 : vector<8x1xf32>
      %97 = arith.subf %94, %96 : vector<8x1xf32>
      %98 = arith.divf %97, %92 : vector<8x1xf32>
      %99 = math.log %98 : vector<8x1xf32>
      %cst_43 = arith.constant 0.000000e+00 : f32
      %100 = vector.broadcast %cst_43 : f32 to vector<8x1xf32>
      %101 = arith.subf %100, %99 : vector<8x1xf32>
      %c0_44 = arith.constant 0 : index
      %c0_45 = arith.constant 0 : index
      %102 = vector.load %arg9[%c0_44, %c0_45] : memref<8x1xf32, #tpu.memory_space<vmem>>, vector<8x1xf32>
      tpu.vector_store %arg9[%c0_44, %c0_45], %101 {strides = array<i32>} : memref<8x1xf32, #tpu.memory_space<vmem>>, vector<8x1xf32>,
    } else {
    }
    return
  }
  func.func @transform_0(%arg0: i32, %arg1: i32) -> i32 {
    %c0_i32 = arith.constant 0 : i32
    %c0_i32_0 = arith.constant 0 : i32
    return %c0_i32 : i32
  }
  func.func @transform_1(%arg0: i32, %arg1: i32) -> i32 {
    %c0_i32 = arith.constant 0 : i32
    %c0_i32_0 = arith.constant 0 : i32
    return %c0_i32 : i32
  }
  func.func @transform_2(%arg0: i32, %arg1: i32) -> (i32, i32) {
    %c0_i32 = arith.constant 0 : i32
    %c0_i32_0 = arith.constant 0 : i32
    return %arg0, %c0_i32 : i32, i32
  }
  func.func @transform_3(%arg0: i32, %arg1: i32) -> (i32, i32) {
    %c0_i32 = arith.constant 0 : i32
    %c0_i32_0 = arith.constant 0 : i32
    return %arg1, %c0_i32 : i32, i32
  }
  func.func @transform_4(%arg0: i32, %arg1: i32) -> (i32, i32) {
    %c0_i32 = arith.constant 0 : i32
    %c0_i32_0 = arith.constant 0 : i32
    return %arg0, %c0_i32 : i32, i32
  }
  func.func @transform_5(%arg0: i32, %arg1: i32) -> (i32, i32) {
    %c0_i32 = arith.constant 0 : i32
    return %arg0, %arg1 : i32, i32
  }
  func.func @transform_6(%arg0: i32, %arg1: i32) -> (i32, i32) {
    %c0_i32 = arith.constant 0 : i32
    %c0_i32_0 = arith.constant 0 : i32
    return %arg0, %c0_i32 : i32, i32
  }
  func.func @transform_7(%arg0: i32, %arg1: i32) -> (i32, i32) {
    %c0_i32 = arith.constant 0 : i32
    %c0_i32_0 = arith.constant 0 : i32
    return %arg0, %c0_i32 : i32, i32
  }
}

</mosaic_0001>

<llo_original>
// kernel: tpu_custom_call.1
$region0: #{tpu_custom_call.1}
  #allocation0 [shape = 'u32[]', space=smem, size = 0x4, offset = 0x4, fixed_abs, tag = 'smem constant byte address 0x4 - core index']
  #allocation1 [shape = 'u32[144,128]{1,0:T(1,128)}', space=vmem, size = 0x12000, scoped, tag = 'internal scratch']
  #allocation2 [shape = 'f32[8,1]{1,0:T(8,128)}', space=vmem, size = 0x1000, scoped, tag = 'scratch operand']
  #allocation3 [shape = 'f32[8,1]{1,0:T(8,128)}', space=vmem, size = 0x1000, scoped, tag = 'scratch operand']
  #allocation4 [shape = 'f32[1]{0:T(128)S(6)}', space=smem, size = 0x200, scoped, tag = 'scoped memory for tpu_custom_call.1']
  #allocation5 [shape = 'f32[1]{0:T(128)S(6)}', space=smem, size = 0x200, scoped, tag = 'scoped memory for tpu_custom_call.1']
  %s0 = inlined_call_operand.<no memory space> [shape: f32[1], index: 0, kind: input, shape index: {}]
  %s1 = inlined_call_operand.<no memory space> [shape: f32[1], index: 1, kind: input, shape index: {}]
  %s2 = inlined_call_operand.vmem [shape: f32[8,128], index: 2, kind: input, shape index: {}]
  %s3 = inlined_call_operand.vmem [shape: f32[8,128], index: 3, kind: input, shape index: {}]
  %s4 = inlined_call_operand.vmem [shape: f32[8,128], index: 4, kind: input, shape index: {}]
  %s5 = inlined_call_operand.hbm [shape: f32[8,8], index: 5, kind: input, shape index: {}]
  %s6 = inlined_call_operand.vmem [shape: f32[8,1], index: 6, kind: input, shape index: {}]
  %s7 = inlined_call_operand.vmem [shape: f32[8,1], index: 7, kind: output, shape index: {}]
  %s8 = sld [smem:[#allocation0]]
  $region50: #{tpu_custom_call.1} parent=0
    _
  %s10 = ssub.s32 1, %s8
  %s11 = scalar_select 0, %s10, %s8
  %12 = sst [smem:[#allocation4]] %s0
  %13 = sst [smem:[#allocation5]] %s1
  $region1: #{tpu_custom_call.1} parent=0
    #allocation6 [shape = 'u8[4096]{0}', space=vmem, size = 0x1000, scoped, tag = 'input window, operand 5, single buffered']
    #allocation7 [shape = 's32[1]{0}', space=sflag, size = 0x4, scoped, tag = 'scoped memory for tpu_custom_call.1']
    %14 = vsyncpa [#allocation7], 0
    // Predicated region
    $region2: #{tpu_custom_call.1} parent=1 // pred_check
      _
    $region3: #{tpu_custom_call.1} parent=1 // pred_check_branch
      %16 = sbr.rel (0) target = $region5
    $region4: #{tpu_custom_call.1} parent=1 // pred_region
      _
    $region5: #{tpu_custom_call.1} parent=1 // pred_fallthru
      _
    // Predicated region
    $region6: #{tpu_custom_call.1} parent=1 // pred_check
      _
    $region7: #{tpu_custom_call.1} parent=1 // pred_check_branch
      %18 = sbr.rel (0) target = $region9
    $region8: #{tpu_custom_call.1} parent=1 // pred_region
      _
    $region9: #{tpu_custom_call.1} parent=1 // pred_fallthru
      _
    // Predicated region
    $region10: #{tpu_custom_call.1} parent=1 // pred_check
      _
    $region11: #{tpu_custom_call.1} parent=1 // pred_check_branch
      %20 = sbr.rel (0) target = $region13
    $region12: #{tpu_custom_call.1} parent=1 // pred_region
      _
    $region13: #{tpu_custom_call.1} parent=1 // pred_fallthru
      _
    // Predicated region
    $region14: #{tpu_custom_call.1} parent=1 // pred_check
      _
    $region15: #{tpu_custom_call.1} parent=1 // pred_check_branch
      %22 = sbr.rel (0) target = $region17
    $region16: #{tpu_custom_call.1} parent=1 // pred_region
      _
    $region17: #{tpu_custom_call.1} parent=1 // pred_fallthru
      _
    // Predicated region
    $region18: #{tpu_custom_call.1} parent=1 // pred_check
      _
    $region19: #{tpu_custom_call.1} parent=1 // pred_check_branch
      %24 = sbr.rel (0) target = $region21
    $region20: #{tpu_custom_call.1} parent=1 // pred_region
      _
    $region21: #{tpu_custom_call.1} parent=1 // pred_fallthru
      _
    // Predicated region
    $region22: #{tpu_custom_call.1} parent=1 // pred_check
      _
    $region23: #{tpu_custom_call.1} parent=1 // pred_check_branch
      %26 = sbr.rel (0) target = $region25
    $region24: #{tpu_custom_call.1} parent=1 // pred_region
      %s28 = ssub.s32 128, 128
      %29 = vsyncadd [#allocation7], %s28
      %s31 = sshll.u32 [#allocation6], 4
      %s32 = int_to_ptr.vmem [resolvable:$true] %s31
      %34 = dma.hbm_to_vmem [thread:$0]  %s5, 128, %s32, [#allocation7]
    $region25: #{tpu_custom_call.1} parent=1 // pred_fallthru
      _
    // Predicated region
    $region26: #{tpu_custom_call.1} parent=1 // pred_check
      _
    $region27: #{tpu_custom_call.1} parent=1 // pred_check_branch
      %36 = sbr.rel (0) target = $region29
    $region28: #{tpu_custom_call.1} parent=1 // pred_region
      _
    $region29: #{tpu_custom_call.1} parent=1 // pred_fallthru
      _
    // Predicated region
    $region30: #{tpu_custom_call.1} parent=1 // pred_check
      _
    $region31: #{tpu_custom_call.1} parent=1 // pred_check_branch
      %38 = sbr.rel (0) target = $region33
    $region32: #{tpu_custom_call.1} parent=1 // pred_region
      %39 = dma.done [#allocation7], 128
    $region33: #{tpu_custom_call.1} parent=1 // pred_fallthru
      _
    %s41 = sld [smem:[#allocation4]]
    %v42 = vstv %s41
    %v43 = vrcp.pop %v42
    %s44 = vtos %v43
    %s45 = sld [smem:[#allocation5]]
    %s46 = smul.f32 %s45, %s44
    %s47 = ssub.f32 0.0, %s46
    %p48 = scmp.eq.s32.totalorder 0, 0
    // Predicated region
    $region34: #{tpu_custom_call.1} parent=1 // pred_check
      %p49 = pneg %p48
    $region35: #{tpu_custom_call.1} parent=1 // pred_check_branch
      %51 = sbr.rel (%p49) target = $region37
    $region36: #{tpu_custom_call.1} parent=1 // pred_region
      %vm52 = vcmask 7168
      %53 = vst.msk [vmem:[#allocation2] sm:$0xff] %vm52, 0.0
      %54 = vst.msk [vmem:[#allocation3] sm:$0xff] %vm52, 0.0
    $region37: #{tpu_custom_call.1} parent=1 // pred_fallthru
      _
    %v55 = vld [vmem:[%s2] sm:$0xff]
    %v56 = vld [vmem:[%s3] sm:$0xff]
    %v57 = vmul.f32 %v55, %v55
    %58 = vadd.xlane.f32.xlu0 %v57
    %v59 = vpop.xlane.xlu0 %58
    %v60 = vrsqrt.pop %v59
    %v61 = vmul.f32 %v59, %v60
    %vm62 = vcmp.eq.f32.partialorder %v59, inf
    %v63 = vsel %vm62, %v59, %v61
    %vm64 = vcmp.eq.f32.partialorder %v59, 0.0
    %v65 = vand.u32 %v59, 2147483648
    %v66 = vsel %vm64, %v65, %v63
    %v67 = vmax.f32 %v66, 1e-08
    %v68 = vrcp.pop %v67
    %v69 = vmul.f32 1.0, %v68
    %v70 = vmul.f32 %v56, %v56
    %71 = vadd.xlane.f32.xlu0 %v70
    %v72 = vpop.xlane.xlu0 %71
    %v73 = vrsqrt.pop %v72
    %v74 = vmul.f32 %v72, %v73
    %vm75 = vcmp.eq.f32.partialorder %v72, inf
    %v76 = vsel %vm75, %v72, %v74
    %vm77 = vcmp.eq.f32.partialorder %v72, 0.0
    %v78 = vand.u32 %v72, 2147483648
    %v79 = vsel %vm77, %v78, %v76
    %v80 = vmax.f32 %v79, 1e-08
    %v81 = vrcp.pop %v80
    %v82 = vmul.f32 1.0, %v81
    %v83 = vmul.f32 %v55, %v69
    %v84 = vmul.f32 %v56, %v82
    %v85 = vpack.c.bf16 %v83, %v83
    %v86 = vunpack.c.l.bf16 %v85
    %v87 = vsub.f32 %v83, %v86
    %v88 = vpack.c.bf16 %v87, %v87
    %v89 = vpack.c.bf16 %v84, %v84
    %v90 = vunpack.c.l.bf16 %v89
    %v91 = vsub.f32 %v84, %v90
    %v92 = vpack.c.bf16 %v91, %v91
    %93 = vmatprep.subr.bf16.mxu0 0
    %94 = vmatpush1.bf16.xpose.msra.mxu0 %v92
    %95 = vmatprep.subr.bf16.mxu0 0
    %96 = vmatpush1.bf16.xpose.msra.mxu0 0
    %97 = vmatprep.subr.bf16.mxu0 0
    %98 = vmatpush1.bf16.xpose.msra.mxu0 0
    %99 = vmatprep.subr.bf16.mxu0 0
    %100 = vmatpush1.bf16.xpose.msra.mxu0 0
    %101 = vmatprep.subr.bf16.mxu0 0
    %102 = vmatpush1.bf16.xpose.msra.mxu0 0
    %103 = vmatprep.subr.bf16.mxu0 0
    %104 = vmatpush1.bf16.xpose.msra.mxu0 0
    %105 = vmatprep.subr.bf16.mxu0 0
    %106 = vmatpush1.bf16.xpose.msra.mxu0 0
    %107 = vmatprep.subr.bf16.mxu0 0
    %108 = vmatpush1.bf16.xpose.msra.mxu0 0
    %109 = vmatprep.subr.bf16.mxu0 0
    %110 = vmatpush1.bf16.xpose.msra.mxu0 0
    %111 = vmatprep.subr.bf16.mxu0 0
    %112 = vmatpush1.bf16.xpose.msra.mxu0 0
    %113 = vmatprep.subr.bf16.mxu0 0
    %114 = vmatpush1.bf16.xpose.msra.mxu0 0
    %115 = vmatprep.subr.bf16.mxu0 0
    %116 = vmatpush1.bf16.xpose.msra.mxu0 0
    %117 = vmatprep.subr.bf16.mxu0 0
    %118 = vmatpush1.bf16.xpose.msra.mxu0 0
    %119 = vmatprep.subr.bf16.mxu0 0
    %120 = vmatpush1.bf16.xpose.msra.mxu0 0
    %121 = vmatprep.subr.bf16.mxu0 0
    %122 = vmatpush1.bf16.xpose.msra.mxu0 0
    %123 = vmatprep.subr.bf16.mxu0 0
    %124 = vmatpush1.bf16.xpose.msra.mxu0 0
    %125 = vmatprep.mubr.bf16.mxu0 0
    %126 = vmatmul.mubr.bf16.gmra.mrb[0].mxu0 %v85
    %v127 = vpop.f32.mrb[0].mxu0
    %v128 = vadd.f32 0.0, %v127
    %v129 = vpop.f32.mrb[0].mxu0
    %v130 = vpop.f32.mrb[0].mxu0
    %v131 = vpop.f32.mrb[0].mxu0
    %132 = vdwg.mxu0
    %133 = vmatprep.subr.bf16.mxu0 0
    %134 = vmatpush1.bf16.xpose.msra.mxu0 %v89
    %135 = vmatprep.subr.bf16.mxu0 0
    %136 = vmatpush1.bf16.xpose.msra.mxu0 0
    %137 = vmatprep.subr.bf16.mxu0 0
    %138 = vmatpush1.bf16.xpose.msra.mxu0 0
    %139 = vmatprep.subr.bf16.mxu0 0
    %140 = vmatpush1.bf16.xpose.msra.mxu0 0
    %141 = vmatprep.subr.bf16.mxu0 0
    %142 = vmatpush1.bf16.xpose.msra.mxu0 0
    %143 = vmatprep.subr.bf16.mxu0 0
    %144 = vmatpush1.bf16.xpose.msra.mxu0 0
    %145 = vmatprep.subr.bf16.mxu0 0
    %146 = vmatpush1.bf16.xpose.msra.mxu0 0
    %147 = vmatprep.subr.bf16.mxu0 0
    %148 = vmatpush1.bf16.xpose.msra.mxu0 0
    %149 = vmatprep.subr.bf16.mxu0 0
    %150 = vmatpush1.bf16.xpose.msra.mxu0 0
    %151 = vmatprep.subr.bf16.mxu0 0
    %152 = vmatpush1.bf16.xpose.msra.mxu0 0
    %153 = vmatprep.subr.bf16.mxu0 0
    %154 = vmatpush1.bf16.xpose.msra.mxu0 0
    %155 = vmatprep.subr.bf16.mxu0 0
    %156 = vmatpush1.bf16.xpose.msra.mxu0 0
    %157 = vmatprep.subr.bf16.mxu0 0
    %158 = vmatpush1.bf16.xpose.msra.mxu0 0
    %159 = vmatprep.subr.bf16.mxu0 0
    %160 = vmatpush1.bf16.xpose.msra.mxu0 0
    %161 = vmatprep.subr.bf16.mxu0 0
    %162 = vmatpush1.bf16.xpose.msra.mxu0 0
    %163 = vmatprep.subr.bf16.mxu0 0
    %164 = vmatpush1.bf16.xpose.msra.mxu0 0
    %165 = vmatprep.mubr.bf16.mxu0 0
    %166 = vmatmul.mubr.bf16.gmra.mrb[0].mxu0 %v85
    %v167 = vpop.f32.mrb[0].mxu0
    %v168 = vadd.f32 %v128, %v167
    %v169 = vpop.f32.mrb[0].mxu0
    %v170 = vpop.f32.mrb[0].mxu0
    %v171 = vpop.f32.mrb[0].mxu0
    %172 = vdwg.mxu0
    %173 = vmatprep.subr.bf16.mxu0 0
    %174 = vmatpush1.bf16.xpose.msra.mxu0 %v89
    %175 = vmatprep.subr.bf16.mxu0 0
    %176 = vmatpush1.bf16.xpose.msra.mxu0 0
    %177 = vmatprep.subr.bf16.mxu0 0
    %178 = vmatpush1.bf16.xpose.msra.mxu0 0
    %179 = vmatprep.subr.bf16.mxu0 0
    %180 = vmatpush1.bf16.xpose.msra.mxu0 0
    %181 = vmatprep.subr.bf16.mxu0 0
    %182 = vmatpush1.bf16.xpose.msra.mxu0 0
    %183 = vmatprep.subr.bf16.mxu0 0
    %184 = vmatpush1.bf16.xpose.msra.mxu0 0
    %185 = vmatprep.subr.bf16.mxu0 0
    %186 = vmatpush1.bf16.xpose.msra.mxu0 0
    %187 = vmatprep.subr.bf16.mxu0 0
    %188 = vmatpush1.bf16.xpose.msra.mxu0 0
    %189 = vmatprep.subr.bf16.mxu0 0
    %190 = vmatpush1.bf16.xpose.msra.mxu0 0
    %191 = vmatprep.subr.bf16.mxu0 0
    %192 = vmatpush1.bf16.xpose.msra.mxu0 0
    %193 = vmatprep.subr.bf16.mxu0 0
    %194 = vmatpush1.bf16.xpose.msra.mxu0 0
    %195 = vmatprep.subr.bf16.mxu0 0
    %196 = vmatpush1.bf16.xpose.msra.mxu0 0
    %197 = vmatprep.subr.bf16.mxu0 0
    %198 = vmatpush1.bf16.xpose.msra.mxu0 0
    %199 = vmatprep.subr.bf16.mxu0 0
    %200 = vmatpush1.bf16.xpose.msra.mxu0 0
    %201 = vmatprep.subr.bf16.mxu0 0
    %202 = vmatpush1.bf16.xpose.msra.mxu0 0
    %203 = vmatprep.subr.bf16.mxu0 0
    %204 = vmatpush1.bf16.xpose.msra.mxu0 0
    %205 = vmatprep.mubr.bf16.mxu0 0
    %206 = vmatmul.mubr.bf16.gmra.mrb[0].mxu0 %v88
    %v207 = vpop.f32.mrb[0].mxu0
    %v208 = vadd.f32 0.0, %v207
    %v209 = vpop.f32.mrb[0].mxu0
    %v210 = vpop.f32.mrb[0].mxu0
    %v211 = vpop.f32.mrb[0].mxu0
    %212 = vdwg.mxu0
    %v213 = vadd.f32 %v168, %v208
    %v214 = vstv %s44
    %v215 = vmul.f32 %v213, %v214
    %v216 = vstv %s47
    %v217 = vadd.f32 %v215, %v216
    %v218 = vmul.f32 %v217, 1.442695
    %v219 = vpow.pop %v218
    %v220 = vld [vmem:[#allocation2] sm:$0xff]
    %vm221 = vcmask 64512
    %v222 = vsel %vm221, %v219, 0.0
    %223 = vadd.xlane.f32.xlu0 %v222
    %v224 = vpop.xlane.xlu0 %223
    %v225 = vadd.f32 %v220, %v224
    %vm226 = vcmask 7168
    %227 = vst.msk [vmem:[#allocation2] sm:$0xff] %vm226, %v225
    %v228 = vld [vmem:[#allocation3] sm:$0xff]
    %v229 = vld [vmem:[#allocation6] sm:$0xff]
    %v230 = vmul.f32 %v219, %v229
    %v231 = vsel %vm221, %v230, 0.0
    %232 = vadd.xlane.f32.xlu0 %v231
    %v233 = vpop.xlane.xlu0 %232
    %v234 = vadd.f32 %v228, %v233
    %235 = vst.msk [vmem:[#allocation3] sm:$0xff] %vm226, %v234
    // Predicated region
    $region38: #{tpu_custom_call.1} parent=1 // pred_check
      %p236 = pneg %p48
    $region39: #{tpu_custom_call.1} parent=1 // pred_check_branch
      %238 = sbr.rel (%p236) target = $region41
    $region40: #{tpu_custom_call.1} parent=1 // pred_region
      %v239 = vmul.f32 %v83, %v83
      %240 = vadd.xlane.f32.xlu0 %v239
      %v241 = vpop.xlane.xlu0 %240
      %v242 = vmul.f32 %v241, %v214
      %v243 = vadd.f32 %v242, %v216
      %v244 = vmul.f32 %v243, 1.442695
      %v245 = vpow.pop %v244
      %v246 = vld [vmem:[%s4] sm:$0xff]
      %v247 = vmul.f32 %v246, %v246
      %248 = vadd.xlane.f32.xlu0 %v247
      %v249 = vpop.xlane.xlu0 %248
      %v250 = vrsqrt.pop %v249
      %v251 = vmul.f32 %v249, %v250
      %vm252 = vcmp.eq.f32.partialorder %v249, inf
      %v253 = vsel %vm252, %v249, %v251
      %vm254 = vcmp.eq.f32.partialorder %v249, 0.0
      %v255 = vand.u32 %v249, 2147483648
      %v256 = vsel %vm254, %v255, %v253
      %v257 = vmax.f32 %v256, 1e-08
      %v258 = vrcp.pop %v257
      %v259 = vmul.f32 1.0, %v258
      %v260 = vmul.f32 %v246, %v259
      %v261 = vmul.f32 %v83, %v260
      %262 = vadd.xlane.f32.xlu0 %v261
      %v263 = vpop.xlane.xlu0 %262
      %v264 = vmul.f32 %v263, %v214
      %v265 = vadd.f32 %v264, %v216
      %v266 = vmul.f32 %v265, 1.442695
      %v267 = vpow.pop %v266
      %v268 = vld [vmem:[#allocation2] sm:$0xff]
      %v269 = vadd.f32 %v267, %v268
      %v270 = vsub.f32 %v269, %v245
      %v271 = vld [vmem:[#allocation3] sm:$0xff]
      %v272 = vadd.f32 %v267, %v271
      %v273 = vld [vmem:[%s6] sm:$0xff]
      %v274 = vmul.f32 %v273, %v245
      %v275 = vsub.f32 %v272, %v274
      %v276 = vrcp.pop %v270
      %v277 = vmul.f32 %v275, %v276
      %v278 = vlog2.pop %v277
      %v279 = vmul.f32 %v278, 0.6931472
      %v280 = vsub.f32 0.0, %v279
      %281 = vst.msk [vmem:[%s7] sm:$0xff] %vm226, %v280
    $region41: #{tpu_custom_call.1} parent=1 // pred_fallthru
      _
    // Predicated region
    $region42: #{tpu_custom_call.1} parent=1 // pred_check
      _
    $region43: #{tpu_custom_call.1} parent=1 // pred_check_branch
      %283 = sbr.rel (0) target = $region45
    $region44: #{tpu_custom_call.1} parent=1 // pred_region
      _
    $region45: #{tpu_custom_call.1} parent=1 // pred_fallthru
      _
    // Predicated region
    $region46: #{tpu_custom_call.1} parent=1 // pred_check
      _
    $region47: #{tpu_custom_call.1} parent=1 // pred_check_branch
      %285 = sbr.rel (0) target = $region49
    $region48: #{tpu_custom_call.1} parent=1 // pred_region
      _
    $region49: #{tpu_custom_call.1} parent=1 // pred_fallthru
      _
    %286 = vsyncpa [#allocation7], 1

</llo_original>
